<compile_context>
chip_gen: v7x
topology: tpu7x:2x2x1
jax: 0.10.0
libtpu: 0.0.40
codegen_flags: <defaults>
</compile_context>

<pallas_src>
import jax
import jax.numpy as jnp
from jax.experimental import pallas as pl
from jax.experimental.pallas import tpu as pltpu

B = 8            # batch_size
N_INPUT = 128    # n_input (genes)
N_HIDDEN = 32    # n_hidden
N_LATENT = 10    # n_latent
AUX_COLS = N_LATENT + 4   # [eps_z | eps_l | local_l_mean | log(l_var) | 1/(2*l_var)]


def _softplus(x):
    # numerically stable softplus, matches F.softplus
    return jnp.maximum(x, 0.0) + jnp.log1p(jnp.exp(-jnp.abs(x)))


def _lgamma(z):
    # Numerical Recipes 'gammln' (Lanczos g=5), valid for z > 0.
    # Only used for lgamma(x + theta) (x = small Poisson counts); f32 accuracy
    # ~1e-5 absolute on these arguments.  Loses relative accuracy for very
    # large counts — acceptable for this synthetic workload.
    t = z + 5.5
    t = t - (z + 0.5) * jnp.log(t)
    ser = (1.000000000190015
           + 76.18009172947146 / (z + 1.0)
           - 86.50532032941677 / (z + 2.0)
           + 24.01409824083091 / (z + 3.0)
           - 1.231739572450155 / (z + 4.0)
           + 0.1208650973866179e-2 / (z + 5.0)
           - 0.5395239384953e-5 / (z + 6.0))
    return -t + jnp.log(2.5066282746310005 * ser / z)


# --------------------------------------------------------------------------
# Single fused kernel: encoders + decoder + ZINB reconstruction + KLs
# --------------------------------------------------------------------------
def _ae_fused_kernel(xg_ref, aux_ref,
                     w_enc_ref, w_head_ref, w_dec1_ref, w_dhead_ref,
                     ps_ref, out_ref):
    f32 = jnp.float32
    G, H, L = N_INPUT, N_HIDDEN, N_LATENT
    eps_c = 1e-8

    # ---- per-sample packed inputs ----
    xg = xg_ref[...]                                   # (TM, 2G)
    x = xg[:, 0:G]                                     # raw counts
    lgamma_x1 = xg[:, G:2 * G]                         # lgamma(x + 1) (precomputed)
    x_ = jnp.log1p(x)                                  # log_variational

    aux = aux_ref[...]                                 # (TM, L+4)
    eps_z = aux[:, 0:L]
    eps_l = aux[:, L:L + 1]
    lm = aux[:, L + 1:L + 2]                           # local_l_mean
    log_lv = aux[:, L + 2:L + 3]                       # log(local_l_var)
    inv_2lv = aux[:, L + 3:L + 4]                      # 1 / (2 * local_l_var)

    # ---- parameter slab (lane-aligned row slices) ----
    b_dhead = ps_ref[0:1, 0:2 * G]                     # decoder head bias
    theta = ps_ref[1:2, 0:G]                           # exp(px_r), 'gene'
    log_theta_eps = ps_ref[2:3, 0:G]                   # log(theta + eps)
    lgamma_theta = ps_ref[3:4, 0:G]                    # lgamma(theta)
    b_enc = ps_ref[4:5, 0:2 * H]                       # fused enc+lib bias (BN-folded)
    b_head = ps_ref[5:6, 0:2 * L + 2]
    b_dec1 = ps_ref[6:7, 0:H]                          # decoder layer-1 bias (BN-folded)

    # ---- fused z-encoder + l-encoder hidden layer (BN folded, Dropout=id) ----
    h_cat = jnp.maximum(
        jnp.dot(x_, w_enc_ref[...], preferred_element_type=f32) + b_enc, 0.0)   # (TM, 2H)

    # ---- fused mean / log-var heads (block-diagonal weight) ----
    heads = jnp.dot(h_cat, w_head_ref[...], preferred_element_type=f32) + b_head
    qz_m = heads[:, 0:L]
    qz_logvar = heads[:, L:2 * L]
    ql_m = heads[:, 2 * L:2 * L + 1]
    ql_logvar = heads[:, 2 * L + 1:2 * L + 2]

    qz_std = jnp.exp(0.5 * qz_logvar)
    qz_v = qz_std * qz_std
    ql_std = jnp.exp(0.5 * ql_logvar)
    ql_v = ql_std * ql_std

    z = qz_m + qz_std * eps_z                          # Normal.rsample
    library = ql_m + ql_std * eps_l

    # ---- decoder (DecoderSCVI, n_batch=0 -> no one-hot concat) ----
    hd = jnp.maximum(
        jnp.dot(z, w_dec1_ref[...], preferred_element_type=f32) + b_dec1, 0.0)   # (TM, H)
    dec_out = jnp.dot(hd, w_dhead_ref[...], preferred_element_type=f32) + b_dhead
    logits = dec_out[:, 0:G]                           # softmax scale head
    pi = dec_out[:, G:2 * G]                           # dropout head

    m = jnp.max(logits, axis=-1, keepdims=True)
    e = jnp.exp(logits - m)
    sum_e = jnp.sum(e, axis=-1, keepdims=True)
    exp_lib = jnp.exp(library)
    mu = (exp_lib * pl.reciprocal(sum_e, approx=True)) * e          # px_rate
    log_mu = (library + (logits - m)) - jnp.log(sum_e)              # log(px_rate)

    # ---- ZINB reconstruction loss ----
    softplus_pi = _softplus(-pi)
    log_theta_mu_eps = jnp.log(theta + mu + eps_c)
    pi_theta_log = -pi + theta * (log_theta_eps - log_theta_mu_eps)
    lgamma_term = _lgamma(x + theta) - lgamma_theta - lgamma_x1
    case_zero = _softplus(pi_theta_log) - softplus_pi
    case_non_zero = (-softplus_pi + pi_theta_log
                     + x * (log_mu - log_theta_mu_eps)
                     + lgamma_term)
    # x is integer count data, so the two cases are mutually exclusive.
    res = jnp.where(x < eps_c, case_zero, case_non_zero)
    reconst = -jnp.sum(res, axis=-1, keepdims=True)                  # (TM, 1)

    # ---- KL(z || N(0,1)) using the logvar head directly ----
    kl_z = jnp.sum(0.5 * (qz_v + qz_m * qz_m - 1.0 - qz_logvar),
                   axis=-1, keepdims=True)                           # (TM, 1)

    # ---- KL(l || N(local_l_mean, local_l_var)) ----
    d = ql_m - lm
    kl_l = 0.5 * (log_lv - ql_logvar) + (ql_v + d * d) * inv_2lv - 0.5   # (TM, 1)

    # column 0 = reconst + kl_l, column 1 = kl_z (direct column writes)
    out_ref[:, 0:1] = reconst + kl_l
    out_ref[:, 1:2] = kl_z


# --------------------------------------------------------------------------
# Parameter init (deterministic, synthetic)
# --------------------------------------------------------------------------
def init_params(key):
    ks = jax.random.split(key, 10)

    def lin(k, fan_in, fan_out):
        kw, kb = jax.random.split(k)
        w = jax.random.normal(kw, (fan_in, fan_out), jnp.float32) * 0.05
        b = jax.random.normal(kb, (1, fan_out), jnp.float32) * 0.01
        return w, b

    p = {}
    p['enc_w1'], p['enc_b1'] = lin(ks[0], N_INPUT, N_HIDDEN)
    p['enc_wm'], p['enc_bm'] = lin(ks[1], N_HIDDEN, N_LATENT)
    p['enc_wv'], p['enc_bv'] = lin(ks[2], N_HIDDEN, N_LATENT)
    p['l_w1'], p['l_b1'] = lin(ks[3], N_INPUT, N_HIDDEN)
    p['l_wm'], p['l_bm'] = lin(ks[4], N_HIDDEN, 1)
    p['l_wv'], p['l_bv'] = lin(ks[5], N_HIDDEN, 1)
    p['dec_w1'], p['dec_b1'] = lin(ks[6], N_LATENT, N_HIDDEN)
    p['dec_ws'], p['dec_bs'] = lin(ks[7], N_HIDDEN, N_INPUT)
    p['dec_wdo'], p['dec_bdo'] = lin(ks[8], N_HIDDEN, N_INPUT)
    p['px_r'] = jax.random.normal(ks[9], (1, N_INPUT), jnp.float32) * 0.1  # 'gene' dispersion

    # BatchNorm1d eval-mode, scVI FCLayers settings (eps=0.001, momentum=0.01),
    # running_mean=0, running_var=1, gamma=1, beta=0 -> per-feature scale/shift.
    bn_scale = jnp.full((1, N_HIDDEN), 1.0 / float(jnp.sqrt(1.0 + 1e-3)), jnp.float32)
    bn_shift = jnp.zeros((1, N_HIDDEN), jnp.float32)
    for name in ('enc', 'l', 'dec'):
        p[f'{name}_bns'] = bn_scale
        p[f'{name}_bnb'] = bn_shift
    return p


# --------------------------------------------------------------------------
# Pack: fold BN, fuse weight heads, build the (8, 256) parameter slab
# --------------------------------------------------------------------------
def pack_params(p):
    f32 = jnp.float32
    G, H, L = N_INPUT, N_HIDDEN, N_LATENT

    # fold eval-mode BatchNorm (y = lin*s + b) into the preceding Linear
    def fold(w, b, s, sh):
        return w * s, b * s + sh

    enc_w1, enc_b1 = fold(p['enc_w1'], p['enc_b1'], p['enc_bns'], p['enc_bnb'])
    l_w1, l_b1 = fold(p['l_w1'], p['l_b1'], p['l_bns'], p['l_bnb'])
    dec_w1, dec_b1 = fold(p['dec_w1'], p['dec_b1'], p['dec_bns'], p['dec_bnb'])

    w_enc = jnp.concatenate([enc_w1, l_w1], axis=1)                   # (G, 2H)
    b_enc = jnp.concatenate([enc_b1, l_b1], axis=1)                   # (1, 2H)

    # block-diagonal head weight: rows 0..H-1 -> z heads, rows H..2H-1 -> l heads
    w_head = jnp.zeros((2 * H, 2 * L + 2), f32)
    w_head = w_head.at[:H, 0:L].set(p['enc_wm'])
    w_head = w_head.at[:H, L:2 * L].set(p['enc_wv'])
    w_head = w_head.at[H:, 2 * L:2 * L + 1].set(p['l_wm'])
    w_head = w_head.at[H:, 2 * L + 1:].set(p['l_wv'])
    b_head = jnp.concatenate([p['enc_bm'], p['enc_bv'], p['l_bm'], p['l_bv']], axis=1)

    w_dhead = jnp.concatenate([p['dec_ws'], p['dec_wdo']], axis=1)    # (H, 2G)
    b_dhead = jnp.concatenate([p['dec_bs'], p['dec_bdo']], axis=1)    # (1, 2G)

    # batch-independent ZINB constants hoisted out of the kernel EUP chain
    theta = jnp.exp(p['px_r'])
    log_theta_eps = jnp.log(theta + 1e-8)
    lgamma_theta = jax.lax.lgamma(theta)

    # single lane-aligned (8, 2G) = (8, 256) f32 slab; each item starts at lane 0
    slab = jnp.zeros((8, 2 * G), f32)
    slab = slab.at[0, :2 * G].set(b_dhead[0])
    slab = slab.at[1, :G].set(theta[0])
    slab = slab.at[2, :G].set(log_theta_eps[0])
    slab = slab.at[3, :G].set(lgamma_theta[0])
    slab = slab.at[4, :2 * H].set(b_enc[0])
    slab = slab.at[5, :2 * L + 2].set(b_head[0])
    slab = slab.at[6, :H].set(dec_b1[0])

    return dict(w_enc=w_enc, w_head=w_head, w_dec1=dec_w1, w_dhead=w_dhead, pslab=slab)


# --------------------------------------------------------------------------
# Forward wrapper: one pallas_call, batch-tiled grid, resident weights
# --------------------------------------------------------------------------
def _ae_forward_fn(packed, x, local_l_mean, local_l_var, eps_z, eps_l):
    G = N_INPUT
    Bt = x.shape[0]
    TM = min(Bt, 128)                    # rows per grid step
    assert Bt % TM == 0
    grid = (Bt // TM,)

    # batch-side precompute (fuses into surrounding XLA ops, stays off the
    # kernel's serial EUP chain)
    lgamma_x1 = jax.lax.lgamma(x + 1.0)
    xg = jnp.concatenate([x, lgamma_x1], axis=1)                       # (B, 2G)
    aux = jnp.concatenate([eps_z, eps_l, local_l_mean,
                           jnp.log(local_l_var),
                           0.5 / local_l_var], axis=1)                 # (B, L+4)

    def resident(arr):   # weights / slab: DMA'd once, VMEM-resident across steps
        return pl.BlockSpec(arr.shape, lambda i: (0, 0))

    out = pl.pallas_call(
        _ae_fused_kernel,
        out_shape=jax.ShapeDtypeStruct((Bt, 2), jnp.float32),
        grid=grid,
        in_specs=[
            pl.BlockSpec((TM, 2 * G), lambda i: (i, 0)),
            pl.BlockSpec((TM, AUX_COLS), lambda i: (i, 0)),
            resident(packed['w_enc']),
            resident(packed['w_head']),
            resident(packed['w_dec1']),
            resident(packed['w_dhead']),
            resident(packed['pslab']),
        ],
        out_specs=pl.BlockSpec((TM, 2), lambda i: (i, 0)),
        compiler_params=pltpu.CompilerParams(dimension_semantics=("parallel",)),
    )(xg, aux,
      packed['w_enc'], packed['w_head'], packed['w_dec1'], packed['w_dhead'],
      packed['pslab'])

    # forward returns (reconst_loss + kl_divergence_l, kl_divergence_z), shape (B,)
    return out[:, 0], out[:, 1]


ae_forward = jax.jit(_ae_forward_fn)


# --------------------------------------------------------------------------
# Pure-JAX reference (raw per-layer params + lax.lgamma) for validation
# --------------------------------------------------------------------------
def reference_forward(p, x, local_l_mean, local_l_var, eps_z, eps_l):
    x_ = jnp.log1p(x)
    bn = lambda h, s, b_: h * s + b_
    h = jnp.maximum(bn(x_ @ p['enc_w1'] + p['enc_b1'], p['enc_bns'], p['enc_bnb']), 0.0)
    qz_m = h @ p['enc_wm'] + p['enc_bm']
    qz_v = jnp.exp(h @ p['enc_wv'] + p['enc_bv'])
    z = qz_m + jnp.sqrt(qz_v) * eps_z
    hl = jnp.maximum(bn(x_ @ p['l_w1'] + p['l_b1'], p['l_bns'], p['l_bnb']), 0.0)
    ql_m = hl @ p['l_wm'] + p['l_bm']
    ql_v = jnp.exp(hl @ p['l_wv'] + p['l_bv'])
    library = ql_m + jnp.sqrt(ql_v) * eps_l
    hd = jnp.maximum(bn(z @ p['dec_w1'] + p['dec_b1'], p['dec_bns'], p['dec_bnb']), 0.0)
    px_scale = jax.nn.softmax(hd @ p['dec_ws'] + p['dec_bs'], axis=-1)
    px_dropout = hd @ p['dec_wdo'] + p['dec_bdo']
    px_rate = jnp.exp(library) * px_scale
    theta = jnp.exp(p['px_r'])

    eps_c = 1e-8
    softplus_pi = jax.nn.softplus(-px_dropout)
    log_theta_eps = jnp.log(theta + eps_c)
    log_theta_mu_eps = jnp.log(theta + px_rate + eps_c)
    pi_theta_log = -px_dropout + theta * (log_theta_eps - log_theta_mu_eps)
    case_zero = jax.nn.softplus(pi_theta_log) - softplus_pi
    case_non_zero = (-softplus_pi + pi_theta_log
                     + x * (jnp.log(px_rate + eps_c) - log_theta_mu_eps)
                     + jax.lax.lgamma(x + theta) - jax.lax.lgamma(theta)
                     - jax.lax.lgamma(x + 1.0))
    res = jnp.where(x < eps_c, case_zero, case_non_zero)
    reconst = -jnp.sum(res, axis=-1)
    kl_z = jnp.sum(0.5 * (qz_v + qz_m ** 2) - 0.5 * jnp.log(qz_v) - 0.5, axis=-1)
    kl_l = jnp.sum(0.5 * (jnp.log(local_l_var) - jnp.log(ql_v))
                   + (ql_v + (ql_m - local_l_mean) ** 2) / (2.0 * local_l_var) - 0.5,
                   axis=-1)
    return reconst + kl_l, kl_z


if __name__ == "__main__":
    key = jax.random.PRNGKey(0)
    kx, kp, kz, kl_ = jax.random.split(key, 4)

    # x: count data (batch_size, n_input)
    x = jax.random.poisson(kx, 4.0, (B, N_INPUT)).astype(jnp.float32)
    params = init_params(kp)
    packed = pack_params(params)

    # deterministic reparameterization noise (Normal.rsample)
    eps_z = jax.random.normal(kz, (B, N_LATENT), jnp.float32)
    eps_l = jax.random.normal(kl_, (B, 1), jnp.float32)

    local_l_mean = jnp.log(jnp.sum(x, axis=1, keepdims=True))
    local_l_var = jnp.ones((B, 1), jnp.float32)

    out1, out2 = ae_forward(packed, x, local_l_mean, local_l_var, eps_z, eps_l)
    jax.block_until_ready((out1, out2))

    assert out1.shape == (B,) and out2.shape == (B,)
    assert bool(jnp.all(jnp.isfinite(out1))) and bool(jnp.all(jnp.isfinite(out2)))

    # sanity check against a plain-JAX reference (loose tolerance: MXU default
    # precision + in-kernel Lanczos lgamma + approx reciprocal vs exact XLA)
    ref1, ref2 = reference_forward(params, x, local_l_mean, local_l_var, eps_z, eps_l)
    assert bool(jnp.allclose(out1, ref1, rtol=5e-2, atol=5e-1)), (out1, ref1)
    assert bool(jnp.allclose(out2, ref2, rtol=5e-2, atol=5e-2)), (out2, ref2)

    print("KERNEL_OK")
</pallas_src>

<mosaic_0001>
module attributes {stable_mosaic.version = 11 : i64} {
  func.func @_ae_fused_kernel(%arg0: i32, %arg1: memref<8x256xf32, #tpu.memory_space<vmem>>, %arg2: memref<8x14xf32, #tpu.memory_space<vmem>>, %arg3: memref<128x64xf32, #tpu.memory_space<vmem>>, %arg4: memref<64x22xf32, #tpu.memory_space<vmem>>, %arg5: memref<10x32xf32, #tpu.memory_space<vmem>>, %arg6: memref<32x256xf32, #tpu.memory_space<vmem>>, %arg7: memref<8x256xf32, #tpu.memory_space<vmem>>, %arg8: memref<8x2xf32, #tpu.memory_space<vmem>>) attributes {dimension_semantics = [#tpu.dimension_semantics<parallel>], iteration_bounds = array<i64: 1>, scalar_prefetch = 0 : i64, scratch_operands = 0 : i64, tpu.core_type = #tpu.core_type<tc>, window_params = [{transform_indices = @transform_0, window_bounds = array<i64: 8, 256>}, {transform_indices = @transform_1, window_bounds = array<i64: 8, 14>}, {pipeline_mode = #tpu.pipeline_mode<synchronous>, transform_indices = @transform_2, window_bounds = array<i64: 128, 64>}, {pipeline_mode = #tpu.pipeline_mode<synchronous>, transform_indices = @transform_3, window_bounds = array<i64: 64, 22>}, {pipeline_mode = #tpu.pipeline_mode<synchronous>, transform_indices = @transform_4, window_bounds = array<i64: 10, 32>}, {pipeline_mode = #tpu.pipeline_mode<synchronous>, transform_indices = @transform_5, window_bounds = array<i64: 32, 256>}, {pipeline_mode = #tpu.pipeline_mode<synchronous>, transform_indices = @transform_6, window_bounds = array<i64: 8, 256>}, {transform_indices = @transform_7, window_bounds = array<i64: 8, 2>}]} {
    %c0 = arith.constant 0 : index
    %c0_0 = arith.constant 0 : index
    %0 = vector.load %arg1[%c0, %c0_0] : memref<8x256xf32, #tpu.memory_space<vmem>>, vector<8x256xf32>
    %1 = vector.extract_strided_slice %0 {offsets = [0, 0], sizes = [8, 128], strides = [1, 1]} : vector<8x256xf32> to vector<8x128xf32>
    %2 = vector.extract_strided_slice %0 {offsets = [0, 128], sizes = [8, 128], strides = [1, 1]} : vector<8x256xf32> to vector<8x128xf32>
    %3 = math.log1p %1 : vector<8x128xf32>
    %c0_1 = arith.constant 0 : index
    %c0_2 = arith.constant 0 : index
    %4 = vector.load %arg2[%c0_1, %c0_2] : memref<8x14xf32, #tpu.memory_space<vmem>>, vector<8x14xf32>
    %5 = vector.extract_strided_slice %4 {offsets = [0, 0], sizes = [8, 10], strides = [1, 1]} : vector<8x14xf32> to vector<8x10xf32>
    %6 = vector.extract_strided_slice %4 {offsets = [0, 10], sizes = [8, 1], strides = [1, 1]} : vector<8x14xf32> to vector<8x1xf32>
    %7 = vector.extract_strided_slice %4 {offsets = [0, 11], sizes = [8, 1], strides = [1, 1]} : vector<8x14xf32> to vector<8x1xf32>
    %8 = vector.extract_strided_slice %4 {offsets = [0, 12], sizes = [8, 1], strides = [1, 1]} : vector<8x14xf32> to vector<8x1xf32>
    %9 = vector.extract_strided_slice %4 {offsets = [0, 13], sizes = [8, 1], strides = [1, 1]} : vector<8x14xf32> to vector<8x1xf32>
    %c0_3 = arith.constant 0 : index
    %c0_4 = arith.constant 0 : index
    %10 = vector.load %arg7[%c0_3, %c0_4] : memref<8x256xf32, #tpu.memory_space<vmem>>, vector<1x256xf32>
    %c1 = arith.constant 1 : index
    %c0_5 = arith.constant 0 : index
    %11 = vector.load %arg7[%c1, %c0_5] : memref<8x256xf32, #tpu.memory_space<vmem>>, vector<1x128xf32>
    %c2 = arith.constant 2 : index
    %c0_6 = arith.constant 0 : index
    %12 = vector.load %arg7[%c2, %c0_6] : memref<8x256xf32, #tpu.memory_space<vmem>>, vector<1x128xf32>
    %c3 = arith.constant 3 : index
    %c0_7 = arith.constant 0 : index
    %13 = vector.load %arg7[%c3, %c0_7] : memref<8x256xf32, #tpu.memory_space<vmem>>, vector<1x128xf32>
    %c4 = arith.constant 4 : index
    %c0_8 = arith.constant 0 : index
    %14 = vector.load %arg7[%c4, %c0_8] : memref<8x256xf32, #tpu.memory_space<vmem>>, vector<1x64xf32>
    %c5 = arith.constant 5 : index
    %c0_9 = arith.constant 0 : index
    %15 = vector.load %arg7[%c5, %c0_9] : memref<8x256xf32, #tpu.memory_space<vmem>>, vector<1x22xf32>
    %c6 = arith.constant 6 : index
    %c0_10 = arith.constant 0 : index
    %16 = vector.load %arg7[%c6, %c0_10] : memref<8x256xf32, #tpu.memory_space<vmem>>, vector<1x32xf32>
    %c0_11 = arith.constant 0 : index
    %c0_12 = arith.constant 0 : index
    %17 = vector.load %arg3[%c0_11, %c0_12] : memref<128x64xf32, #tpu.memory_space<vmem>>, vector<128x64xf32>
    %cst = arith.constant dense<0.000000e+00> : vector<8x64xf32>
    %18 = tpu.matmul %3, %17, %cst {dimension_numbers = #tpu.dot_dimension_numbers<[1], [0], [0], [1], [0, 0, 1, 1], [], []>} : vector<8x128xf32>, vector<128x64xf32>, vector<8x64xf32> -> vector<8x64xf32>
    %19 = vector.broadcast %14 : vector<1x64xf32> to vector<8x64xf32>
    %20 = arith.addf %18, %19 : vector<8x64xf32>
    %cst_13 = arith.constant 0.000000e+00 : f32
    %21 = vector.broadcast %cst_13 : f32 to vector<8x64xf32>
    %22 = arith.maximumf %20, %21 : vector<8x64xf32>
    %c0_14 = arith.constant 0 : index
    %c0_15 = arith.constant 0 : index
    %23 = vector.load %arg4[%c0_14, %c0_15] : memref<64x22xf32, #tpu.memory_space<vmem>>, vector<64x22xf32>
    %cst_16 = arith.constant dense<0.000000e+00> : vector<8x22xf32>
    %24 = tpu.matmul %22, %23, %cst_16 {dimension_numbers = #tpu.dot_dimension_numbers<[1], [0], [0], [1], [0, 0, 1, 1], [], []>} : vector<8x64xf32>, vector<64x22xf32>, vector<8x22xf32> -> vector<8x22xf32>
    %25 = vector.broadcast %15 : vector<1x22xf32> to vector<8x22xf32>
    %26 = arith.addf %24, %25 : vector<8x22xf32>
    %27 = vector.extract_strided_slice %26 {offsets = [0, 0], sizes = [8, 10], strides = [1, 1]} : vector<8x22xf32> to vector<8x10xf32>
    %28 = vector.extract_strided_slice %26 {offsets = [0, 10], sizes = [8, 10], strides = [1, 1]} : vector<8x22xf32> to vector<8x10xf32>
    %29 = vector.extract_strided_slice %26 {offsets = [0, 20], sizes = [8, 1], strides = [1, 1]} : vector<8x22xf32> to vector<8x1xf32>
    %30 = vector.extract_strided_slice %26 {offsets = [0, 21], sizes = [8, 1], strides = [1, 1]} : vector<8x22xf32> to vector<8x1xf32>
    %cst_17 = arith.constant 5.000000e-01 : f32
    %31 = vector.broadcast %cst_17 : f32 to vector<8x10xf32>
    %32 = arith.mulf %31, %28 : vector<8x10xf32>
    %33 = math.exp %32 : vector<8x10xf32>
    %34 = arith.mulf %33, %33 : vector<8x10xf32>
    %cst_18 = arith.constant 5.000000e-01 : f32
    %35 = vector.broadcast %cst_18 : f32 to vector<8x1xf32>
    %36 = arith.mulf %35, %30 : vector<8x1xf32>
    %37 = math.exp %36 : vector<8x1xf32>
    %38 = arith.mulf %37, %37 : vector<8x1xf32>
    %39 = arith.mulf %33, %5 : vector<8x10xf32>
    %40 = arith.addf %27, %39 : vector<8x10xf32>
    %41 = arith.mulf %37, %6 : vector<8x1xf32>
    %42 = arith.addf %29, %41 : vector<8x1xf32>
    %c0_19 = arith.constant 0 : index
    %c0_20 = arith.constant 0 : index
    %43 = vector.load %arg5[%c0_19, %c0_20] : memref<10x32xf32, #tpu.memory_space<vmem>>, vector<10x32xf32>
    %cst_21 = arith.constant dense<0.000000e+00> : vector<8x32xf32>
    %44 = tpu.matmul %40, %43, %cst_21 {dimension_numbers = #tpu.dot_dimension_numbers<[1], [0], [0], [1], [0, 0, 1, 1], [], []>} : vector<8x10xf32>, vector<10x32xf32>, vector<8x32xf32> -> vector<8x32xf32>
    %45 = vector.broadcast %16 : vector<1x32xf32> to vector<8x32xf32>
    %46 = arith.addf %44, %45 : vector<8x32xf32>
    %cst_22 = arith.constant 0.000000e+00 : f32
    %47 = vector.broadcast %cst_22 : f32 to vector<8x32xf32>
    %48 = arith.maximumf %46, %47 : vector<8x32xf32>
    %c0_23 = arith.constant 0 : index
    %c0_24 = arith.constant 0 : index
    %49 = vector.load %arg6[%c0_23, %c0_24] : memref<32x256xf32, #tpu.memory_space<vmem>>, vector<32x256xf32>
    %cst_25 = arith.constant dense<0.000000e+00> : vector<8x256xf32>
    %50 = tpu.matmul %48, %49, %cst_25 {dimension_numbers = #tpu.dot_dimension_numbers<[1], [0], [0], [1], [0, 0, 1, 1], [], []>} : vector<8x32xf32>, vector<32x256xf32>, vector<8x256xf32> -> vector<8x256xf32>
    %51 = vector.broadcast %10 : vector<1x256xf32> to vector<8x256xf32>
    %52 = arith.addf %50, %51 : vector<8x256xf32>
    %53 = vector.extract_strided_slice %52 {offsets = [0, 0], sizes = [8, 128], strides = [1, 1]} : vector<8x256xf32> to vector<8x128xf32>
    %54 = vector.extract_strided_slice %52 {offsets = [0, 128], sizes = [8, 128], strides = [1, 1]} : vector<8x256xf32> to vector<8x128xf32>
    %cst_26 = arith.constant dense<0xFF800000> : vector<8xf32>
    %55 = vector.multi_reduction <maximumf>, %53, %cst_26 [1] : vector<8x128xf32> to vector<8xf32>
    %56 = vector.shape_cast %55 : vector<8xf32> to vector<8x1xf32>
    %57 = vector.broadcast %56 : vector<8x1xf32> to vector<8x128xf32>
    %58 = arith.subf %53, %57 : vector<8x128xf32>
    %59 = math.exp %58 : vector<8x128xf32>
    %cst_27 = arith.constant dense<0.000000e+00> : vector<8xf32>
    %60 = vector.multi_reduction <add>, %59, %cst_27 [1] : vector<8x128xf32> to vector<8xf32>
    %61 = vector.shape_cast %60 : vector<8xf32> to vector<8x1xf32>
    %62 = math.exp %42 : vector<8x1xf32>
    %63 = tpu.reciprocal %61 {approx = true} : vector<8x1xf32> -> vector<8x1xf32>
    %64 = arith.mulf %62, %63 : vector<8x1xf32>
    %65 = vector.broadcast %64 : vector<8x1xf32> to vector<8x128xf32>
    %66 = arith.mulf %65, %59 : vector<8x128xf32>
    %67 = vector.broadcast %56 : vector<8x1xf32> to vector<8x128xf32>
    %68 = arith.subf %53, %67 : vector<8x128xf32>
    %69 = vector.broadcast %42 : vector<8x1xf32> to vector<8x128xf32>
    %70 = arith.addf %69, %68 : vector<8x128xf32>
    %71 = math.log %61 : vector<8x1xf32>
    %72 = vector.broadcast %71 : vector<8x1xf32> to vector<8x128xf32>
    %73 = arith.subf %70, %72 : vector<8x128xf32>
    %cst_28 = arith.constant 0.000000e+00 : f32
    %74 = vector.broadcast %cst_28 : f32 to vector<8x128xf32>
    %75 = arith.subf %74, %54 : vector<8x128xf32>
    %cst_29 = arith.constant 0.000000e+00 : f32
    %76 = vector.broadcast %cst_29 : f32 to vector<8x128xf32>
    %77 = arith.maximumf %75, %76 : vector<8x128xf32>
    %78 = math.absf %75 : vector<8x128xf32>
    %cst_30 = arith.constant 0.000000e+00 : f32
    %79 = vector.broadcast %cst_30 : f32 to vector<8x128xf32>
    %80 = arith.subf %79, %78 : vector<8x128xf32>
    %81 = math.exp %80 : vector<8x128xf32>
    %82 = math.log1p %81 : vector<8x128xf32>
    %83 = arith.addf %77, %82 : vector<8x128xf32>
    %84 = vector.broadcast %11 : vector<1x128xf32> to vector<8x128xf32>
    %85 = arith.addf %84, %66 : vector<8x128xf32>
    %cst_31 = arith.constant 9.99999993E-9 : f32
    %86 = vector.broadcast %cst_31 : f32 to vector<8x128xf32>
    %87 = arith.addf %85, %86 : vector<8x128xf32>
    %88 = math.log %87 : vector<8x128xf32>
    %cst_32 = arith.constant 0.000000e+00 : f32
    %89 = vector.broadcast %cst_32 : f32 to vector<8x128xf32>
    %90 = arith.subf %89, %54 : vector<8x128xf32>
    %91 = vector.broadcast %12 : vector<1x128xf32> to vector<8x128xf32>
    %92 = arith.subf %91, %88 : vector<8x128xf32>
    %93 = vector.broadcast %11 : vector<1x128xf32> to vector<8x128xf32>
    %94 = arith.mulf %93, %92 : vector<8x128xf32>
    %95 = arith.addf %90, %94 : vector<8x128xf32>
    %96 = vector.broadcast %11 : vector<1x128xf32> to vector<8x128xf32>
    %97 = arith.addf %1, %96 : vector<8x128xf32>
    %cst_33 = arith.constant 5.500000e+00 : f32
    %98 = vector.broadcast %cst_33 : f32 to vector<8x128xf32>
    %99 = arith.addf %97, %98 : vector<8x128xf32>
    %cst_34 = arith.constant 5.000000e-01 : f32
    %100 = vector.broadcast %cst_34 : f32 to vector<8x128xf32>
    %101 = arith.addf %97, %100 : vector<8x128xf32>
    %102 = math.log %99 : vector<8x128xf32>
    %103 = arith.mulf %101, %102 : vector<8x128xf32>
    %104 = arith.subf %99, %103 : vector<8x128xf32>
    %cst_35 = arith.constant 1.000000e+00 : f32
    %105 = vector.broadcast %cst_35 : f32 to vector<8x128xf32>
    %106 = arith.addf %97, %105 : vector<8x128xf32>
    %cst_36 = arith.constant 76.1800919 : f32
    %107 = vector.broadcast %cst_36 : f32 to vector<8x128xf32>
    %108 = arith.divf %107, %106 : vector<8x128xf32>
    %cst_37 = arith.constant 1.000000e+00 : f32
    %109 = vector.broadcast %cst_37 : f32 to vector<8x128xf32>
    %110 = arith.addf %109, %108 : vector<8x128xf32>
    %cst_38 = arith.constant 2.000000e+00 : f32
    %111 = vector.broadcast %cst_38 : f32 to vector<8x128xf32>
    %112 = arith.addf %97, %111 : vector<8x128xf32>
    %cst_39 = arith.constant 86.5053177 : f32
    %113 = vector.broadcast %cst_39 : f32 to vector<8x128xf32>
    %114 = arith.divf %113, %112 : vector<8x128xf32>
    %115 = arith.subf %110, %114 : vector<8x128xf32>
    %cst_40 = arith.constant 3.000000e+00 : f32
    %116 = vector.broadcast %cst_40 : f32 to vector<8x128xf32>
    %117 = arith.addf %97, %116 : vector<8x128xf32>
    %cst_41 = arith.constant 2.401410e+01 : f32
    %118 = vector.broadcast %cst_41 : f32 to vector<8x128xf32>
    %119 = arith.divf %118, %117 : vector<8x128xf32>
    %120 = arith.addf %115, %119 : vector<8x128xf32>
    %cst_42 = arith.constant 4.000000e+00 : f32
    %121 = vector.broadcast %cst_42 : f32 to vector<8x128xf32>
    %122 = arith.addf %97, %121 : vector<8x128xf32>
    %cst_43 = arith.constant 1.23173952 : f32
    %123 = vector.broadcast %cst_43 : f32 to vector<8x128xf32>
    %124 = arith.divf %123, %122 : vector<8x128xf32>
    %125 = arith.subf %120, %124 : vector<8x128xf32>
    %cst_44 = arith.constant 5.000000e+00 : f32
    %126 = vector.broadcast %cst_44 : f32 to vector<8x128xf32>
    %127 = arith.addf %97, %126 : vector<8x128xf32>
    %cst_45 = arith.constant 0.001208651 : f32
    %128 = vector.broadcast %cst_45 : f32 to vector<8x128xf32>
    %129 = arith.divf %128, %127 : vector<8x128xf32>
    %130 = arith.addf %125, %129 : vector<8x128xf32>
    %cst_46 = arith.constant 6.000000e+00 : f32
    %131 = vector.broadcast %cst_46 : f32 to vector<8x128xf32>
    %132 = arith.addf %97, %131 : vector<8x128xf32>
    %cst_47 = arith.constant 5.39523944E-6 : f32
    %133 = vector.broadcast %cst_47 : f32 to vector<8x128xf32>
    %134 = arith.divf %133, %132 : vector<8x128xf32>
    %135 = arith.subf %130, %134 : vector<8x128xf32>
    %cst_48 = arith.constant 0.000000e+00 : f32
    %136 = vector.broadcast %cst_48 : f32 to vector<8x128xf32>
    %137 = arith.subf %136, %104 : vector<8x128xf32>
    %cst_49 = arith.constant 2.50662827 : f32
    %138 = vector.broadcast %cst_49 : f32 to vector<8x128xf32>
    %139 = arith.mulf %138, %135 : vector<8x128xf32>
    %140 = arith.divf %139, %97 : vector<8x128xf32>
    %141 = math.log %140 : vector<8x128xf32>
    %142 = arith.addf %137, %141 : vector<8x128xf32>
    %143 = vector.broadcast %13 : vector<1x128xf32> to vector<8x128xf32>
    %144 = arith.subf %142, %143 : vector<8x128xf32>
    %145 = arith.subf %144, %2 : vector<8x128xf32>
    %cst_50 = arith.constant 0.000000e+00 : f32
    %146 = vector.broadcast %cst_50 : f32 to vector<8x128xf32>
    %147 = arith.maximumf %95, %146 : vector<8x128xf32>
    %148 = math.absf %95 : vector<8x128xf32>
    %cst_51 = arith.constant 0.000000e+00 : f32
    %149 = vector.broadcast %cst_51 : f32 to vector<8x128xf32>
    %150 = arith.subf %149, %148 : vector<8x128xf32>
    %151 = math.exp %150 : vector<8x128xf32>
    %152 = math.log1p %151 : vector<8x128xf32>
    %153 = arith.addf %147, %152 : vector<8x128xf32>
    %154 = arith.subf %153, %83 : vector<8x128xf32>
    %cst_52 = arith.constant 0.000000e+00 : f32
    %155 = vector.broadcast %cst_52 : f32 to vector<8x128xf32>
    %156 = arith.subf %155, %83 : vector<8x128xf32>
    %157 = arith.addf %156, %95 : vector<8x128xf32>
    %158 = arith.subf %73, %88 : vector<8x128xf32>
    %159 = arith.mulf %1, %158 : vector<8x128xf32>
    %160 = arith.addf %157, %159 : vector<8x128xf32>
    %161 = arith.addf %160, %145 : vector<8x128xf32>
    %cst_53 = arith.constant 9.99999993E-9 : f32
    %162 = vector.broadcast %cst_53 : f32 to vector<8x128xf32>
    %163 = arith.cmpf olt, %1, %162 : vector<8x128xf32>
    %164 = arith.select %163, %154, %161 : vector<8x128xi1>, vector<8x128xf32>
    %cst_54 = arith.constant dense<0.000000e+00> : vector<8xf32>
    %165 = vector.multi_reduction <add>, %164, %cst_54 [1] : vector<8x128xf32> to vector<8xf32>
    %166 = vector.shape_cast %165 : vector<8xf32> to vector<8x1xf32>
    %cst_55 = arith.constant 0.000000e+00 : f32
    %167 = vector.broadcast %cst_55 : f32 to vector<8x1xf32>
    %168 = arith.subf %167, %166 : vector<8x1xf32>
    %169 = arith.mulf %27, %27 : vector<8x10xf32>
    %170 = arith.addf %34, %169 : vector<8x10xf32>
    %cst_56 = arith.constant 1.000000e+00 : f32
    %171 = vector.broadcast %cst_56 : f32 to vector<8x10xf32>
    %172 = arith.subf %170, %171 : vector<8x10xf32>
    %173 = arith.subf %172, %28 : vector<8x10xf32>
    %cst_57 = arith.constant 5.000000e-01 : f32
    %174 = vector.broadcast %cst_57 : f32 to vector<8x10xf32>
    %175 = arith.mulf %174, %173 : vector<8x10xf32>
    %cst_58 = arith.constant dense<0.000000e+00> : vector<8xf32>
    %176 = vector.multi_reduction <add>, %175, %cst_58 [1] : vector<8x10xf32> to vector<8xf32>
    %177 = vector.shape_cast %176 : vector<8xf32> to vector<8x1xf32>
    %178 = arith.subf %29, %7 : vector<8x1xf32>
    %179 = arith.subf %8, %30 : vector<8x1xf32>
    %cst_59 = arith.constant 5.000000e-01 : f32
    %180 = vector.broadcast %cst_59 : f32 to vector<8x1xf32>
    %181 = arith.mulf %180, %179 : vector<8x1xf32>
    %182 = arith.mulf %178, %178 : vector<8x1xf32>
    %183 = arith.addf %38, %182 : vector<8x1xf32>
    %184 = arith.mulf %183, %9 : vector<8x1xf32>
    %185 = arith.addf %181, %184 : vector<8x1xf32>
    %cst_60 = arith.constant 5.000000e-01 : f32
    %186 = vector.broadcast %cst_60 : f32 to vector<8x1xf32>
    %187 = arith.subf %185, %186 : vector<8x1xf32>
    %188 = arith.addf %168, %187 : vector<8x1xf32>
    %c0_61 = arith.constant 0 : index
    %c0_62 = arith.constant 0 : index
    %189 = vector.load %arg8[%c0_61, %c0_62] : memref<8x2xf32, #tpu.memory_space<vmem>>, vector<8x1xf32>
    tpu.vector_store %arg8[%c0_61, %c0_62], %188 {strides = array<i32>} : memref<8x2xf32, #tpu.memory_space<vmem>>, vector<8x1xf32>,
    %c0_63 = arith.constant 0 : index
    %c1_64 = arith.constant 1 : index
    %190 = vector.load %arg8[%c0_63, %c1_64] : memref<8x2xf32, #tpu.memory_space<vmem>>, vector<8x1xf32>
    tpu.vector_store %arg8[%c0_63, %c1_64], %177 {strides = array<i32>} : memref<8x2xf32, #tpu.memory_space<vmem>>, vector<8x1xf32>,
    return
  }
  func.func @transform_0(%arg0: i32) -> (i32, i32) {
    %c0_i32 = arith.constant 0 : i32
    %c0_i32_0 = arith.constant 0 : i32
    return %arg0, %c0_i32 : i32, i32
  }
  func.func @transform_1(%arg0: i32) -> (i32, i32) {
    %c0_i32 = arith.constant 0 : i32
    %c0_i32_0 = arith.constant 0 : i32
    return %arg0, %c0_i32 : i32, i32
  }
  func.func @transform_2(%arg0: i32) -> (i32, i32) {
    %c0_i32 = arith.constant 0 : i32
    %c0_i32_0 = arith.constant 0 : i32
    %c0_i32_1 = arith.constant 0 : i32
    return %c0_i32, %c0_i32_0 : i32, i32
  }
  func.func @transform_3(%arg0: i32) -> (i32, i32) {
    %c0_i32 = arith.constant 0 : i32
    %c0_i32_0 = arith.constant 0 : i32
    %c0_i32_1 = arith.constant 0 : i32
    return %c0_i32, %c0_i32_0 : i32, i32
  }
  func.func @transform_4(%arg0: i32) -> (i32, i32) {
    %c0_i32 = arith.constant 0 : i32
    %c0_i32_0 = arith.constant 0 : i32
    %c0_i32_1 = arith.constant 0 : i32
    return %c0_i32, %c0_i32_0 : i32, i32
  }
  func.func @transform_5(%arg0: i32) -> (i32, i32) {
    %c0_i32 = arith.constant 0 : i32
    %c0_i32_0 = arith.constant 0 : i32
    %c0_i32_1 = arith.constant 0 : i32
    return %c0_i32, %c0_i32_0 : i32, i32
  }
  func.func @transform_6(%arg0: i32) -> (i32, i32) {
    %c0_i32 = arith.constant 0 : i32
    %c0_i32_0 = arith.constant 0 : i32
    %c0_i32_1 = arith.constant 0 : i32
    return %c0_i32, %c0_i32_0 : i32, i32
  }
  func.func @transform_7(%arg0: i32) -> (i32, i32) {
    %c0_i32 = arith.constant 0 : i32
    %c0_i32_0 = arith.constant 0 : i32
    return %arg0, %c0_i32 : i32, i32
  }
}

</mosaic_0001>

<llo_original>
// kernel: _ae_forward_fn.1
$region0: #{_ae_forward_fn.1}
  #allocation0 [shape = 'u32[]', space=smem, size = 0x4, offset = 0x4, fixed_abs, tag = 'smem constant byte address 0x4 - core index']
  #allocation1 [shape = 'u32[144,128]{1,0:T(1,128)}', space=vmem, size = 0x12000, scoped, tag = 'internal scratch']
  %s0 = inlined_call_operand.vmem [shape: f32[8,256], index: 0, kind: input, shape index: {}]
  %s1 = inlined_call_operand.vmem [shape: f32[8,14], index: 1, kind: input, shape index: {}]
  %s2 = inlined_call_operand.vmem [shape: f32[128,64], index: 2, kind: input, shape index: {}]
  %s3 = inlined_call_operand.vmem [shape: f32[64,22], index: 3, kind: input, shape index: {}]
  %s4 = inlined_call_operand.vmem [shape: f32[10,32], index: 4, kind: input, shape index: {}]
  %s5 = inlined_call_operand.vmem [shape: f32[32,256], index: 5, kind: input, shape index: {}]
  %s6 = inlined_call_operand.vmem [shape: f32[8,256], index: 6, kind: input, shape index: {}]
  %s7 = inlined_call_operand.vmem [shape: f32[8,2], index: 7, kind: output, shape index: {}]
  %s8 = sld [smem:[#allocation0]]
  $region38: #{_ae_forward_fn.1} parent=0
    _
  %s10 = ssub.s32 1, %s8
  %s11 = scalar_select 0, %s10, %s8
  // Predicated region
  $region2: #{_ae_forward_fn.1} parent=0 // pred_check
    _
  $region3: #{_ae_forward_fn.1} parent=0 // pred_check_branch
    %13 = sbr.rel (0) target = $region5
  $region4: #{_ae_forward_fn.1} parent=0 // pred_region
    _
  $region5: #{_ae_forward_fn.1} parent=0 // pred_fallthru
    _
  // Predicated region
  $region6: #{_ae_forward_fn.1} parent=0 // pred_check
    _
  $region7: #{_ae_forward_fn.1} parent=0 // pred_check_branch
    %15 = sbr.rel (0) target = $region9
  $region8: #{_ae_forward_fn.1} parent=0 // pred_region
    _
  $region9: #{_ae_forward_fn.1} parent=0 // pred_fallthru
    _
  // Predicated region
  $region10: #{_ae_forward_fn.1} parent=0 // pred_check
    _
  $region11: #{_ae_forward_fn.1} parent=0 // pred_check_branch
    %17 = sbr.rel (0) target = $region13
  $region12: #{_ae_forward_fn.1} parent=0 // pred_region
    _
  $region13: #{_ae_forward_fn.1} parent=0 // pred_fallthru
    _
  // Predicated region
  $region14: #{_ae_forward_fn.1} parent=0 // pred_check
    _
  $region15: #{_ae_forward_fn.1} parent=0 // pred_check_branch
    %19 = sbr.rel (0) target = $region17
  $region16: #{_ae_forward_fn.1} parent=0 // pred_region
    _
  $region17: #{_ae_forward_fn.1} parent=0 // pred_fallthru
    _
  // Predicated region
  $region18: #{_ae_forward_fn.1} parent=0 // pred_check
    _
  $region19: #{_ae_forward_fn.1} parent=0 // pred_check_branch
    %21 = sbr.rel (0) target = $region21
  $region20: #{_ae_forward_fn.1} parent=0 // pred_region
    _
  $region21: #{_ae_forward_fn.1} parent=0 // pred_fallthru
    _
  // Predicated region
  $region22: #{_ae_forward_fn.1} parent=0 // pred_check
    _
  $region23: #{_ae_forward_fn.1} parent=0 // pred_check_branch
    %23 = sbr.rel (0) target = $region25
  $region24: #{_ae_forward_fn.1} parent=0 // pred_region
    _
  $region25: #{_ae_forward_fn.1} parent=0 // pred_fallthru
    _
  // Predicated region
  $region26: #{_ae_forward_fn.1} parent=0 // pred_check
    _
  $region27: #{_ae_forward_fn.1} parent=0 // pred_check_branch
    %25 = sbr.rel (0) target = $region29
  $region28: #{_ae_forward_fn.1} parent=0 // pred_region
    _
  $region29: #{_ae_forward_fn.1} parent=0 // pred_fallthru
    _
  %v26 = vld [vmem:[%s0] sm:$0xff]
  %v27 = vld [vmem:[%s0 + $0x8] sm:$0xff]
  %v28 = vadd.f32 %v26, 1.0
  %v29 = vlog2.pop %v28
  %v30 = vmul.f32 %v29, 0.6931472
  %v31 = vmul.f32 -0.5, %v26
  %v32 = vadd.f32 %v31, 1.0
  %v33 = vmul.f32 %v32, %v26
  %v34 = vand.u32 2147483647, %v26
  %vm35 = vcmp.lt.f32.partialorder %v34, 0.0004427343
  %v36 = vsel %vm35, %v33, %v30
  %v37 = vld [vmem:[%s1] sm:$0xff]
  %v38 = vld [vmem:[%s6] ss:$8 sm:$0x3]
  %v39 = vld [vmem:[%s6 + $0x1] ss:$0 sm:$0xff]
  %v40 = vld [vmem:[%s6 + $0x2] ss:$0 sm:$0xff]
  %v41 = vld [vmem:[%s6 + $0x3] ss:$0 sm:$0xff]
  %v42 = vld [vmem:[%s6 + $0x4] ss:$0 sm:$0xff]
  %v43 = vld [vmem:[%s6 + $0x5] ss:$0 sm:$0xff]
  %v44 = vld [vmem:[%s6 + $0x6] ss:$0 sm:$0xff]
  %v45 = vld [vmem:[%s2] sm:$0xff]
  %v46 = vld [vmem:[%s2 + $0x8] sm:$0xff]
  %v47 = vld [vmem:[%s2 + $0x10] sm:$0xff]
  %v48 = vld [vmem:[%s2 + $0x18] sm:$0xff]
  %v49 = vld [vmem:[%s2 + $0x20] sm:$0xff]
  %v50 = vld [vmem:[%s2 + $0x28] sm:$0xff]
  %v51 = vld [vmem:[%s2 + $0x30] sm:$0xff]
  %v52 = vld [vmem:[%s2 + $0x38] sm:$0xff]
  %v53 = vld [vmem:[%s2 + $0x40] sm:$0xff]
  %v54 = vld [vmem:[%s2 + $0x48] sm:$0xff]
  %v55 = vld [vmem:[%s2 + $0x50] sm:$0xff]
  %v56 = vld [vmem:[%s2 + $0x58] sm:$0xff]
  %v57 = vld [vmem:[%s2 + $0x60] sm:$0xff]
  %v58 = vld [vmem:[%s2 + $0x68] sm:$0xff]
  %v59 = vld [vmem:[%s2 + $0x70] sm:$0xff]
  %v60 = vld [vmem:[%s2 + $0x78] sm:$0xff]
  %61 = vmatprep.subr.mxu0 0.0
  %62 = vmatpush1.msra.mxu0 %v45
  %63 = vmatprep.subr.mxu0 0.0
  %64 = vmatpush1.msra.mxu0 %v46
  %65 = vmatprep.subr.mxu0 0.0
  %66 = vmatpush1.msra.mxu0 %v47
  %67 = vmatprep.subr.mxu0 0.0
  %68 = vmatpush1.msra.mxu0 %v48
  %69 = vmatprep.subr.mxu0 0.0
  %70 = vmatpush1.msra.mxu0 %v49
  %71 = vmatprep.subr.mxu0 0.0
  %72 = vmatpush1.msra.mxu0 %v50
  %73 = vmatprep.subr.mxu0 0.0
  %74 = vmatpush1.msra.mxu0 %v51
  %75 = vmatprep.subr.mxu0 0.0
  %76 = vmatpush1.msra.mxu0 %v52
  %77 = vmatprep.subr.mxu0 0.0
  %78 = vmatpush1.msra.mxu0 %v53
  %79 = vmatprep.subr.mxu0 0.0
  %80 = vmatpush1.msra.mxu0 %v54
  %81 = vmatprep.subr.mxu0 0.0
  %82 = vmatpush1.msra.mxu0 %v55
  %83 = vmatprep.subr.mxu0 0.0
  %84 = vmatpush1.msra.mxu0 %v56
  %85 = vmatprep.subr.mxu0 0.0
  %86 = vmatpush1.msra.mxu0 %v57
  %87 = vmatprep.subr.mxu0 0.0
  %88 = vmatpush1.msra.mxu0 %v58
  %89 = vmatprep.subr.mxu0 0.0
  %90 = vmatpush1.msra.mxu0 %v59
  %91 = vmatprep.subr.mxu0 0.0
  %92 = vmatpush1.msra.mxu0 %v60
  %93 = vmatprep.subr.mxu0 0.0
  %94 = vmatpush1.msra.mxu0 0.0
  %95 = vmatprep.subr.mxu0 0.0
  %96 = vmatpush1.msra.mxu0 0.0
  %97 = vmatprep.subr.mxu0 0.0
  %98 = vmatpush1.msra.mxu0 0.0
  %99 = vmatprep.subr.mxu0 0.0
  %100 = vmatpush1.msra.mxu0 0.0
  %101 = vmatprep.subr.mxu0 0.0
  %102 = vmatpush1.msra.mxu0 0.0
  %103 = vmatprep.subr.mxu0 0.0
  %104 = vmatpush1.msra.mxu0 0.0
  %105 = vmatprep.subr.mxu0 0.0
  %106 = vmatpush1.msra.mxu0 0.0
  %107 = vmatprep.subr.mxu0 0.0
  %108 = vmatpush1.msra.mxu0 0.0
  %109 = vmatprep.subr.mxu0 0.0
  %110 = vmatpush1.msra.mxu0 0.0
  %111 = vmatprep.subr.mxu0 0.0
  %112 = vmatpush1.msra.mxu0 0.0
  %113 = vmatprep.subr.mxu0 0.0
  %114 = vmatpush1.msra.mxu0 0.0
  %115 = vmatprep.subr.mxu0 0.0
  %116 = vmatpush1.msra.mxu0 0.0
  %117 = vmatprep.subr.mxu0 0.0
  %118 = vmatpush1.msra.mxu0 0.0
  %119 = vmatprep.subr.mxu0 0.0
  %120 = vmatpush1.msra.mxu0 0.0
  %121 = vmatprep.subr.mxu0 0.0
  %122 = vmatpush1.msra.mxu0 0.0
  %123 = vmatprep.subr.mxu0 0.0
  %124 = vmatpush1.msra.mxu0 0.0
  %125 = vmatprep.mubr.f32.mxu0 0.0
  %126 = vmatmul.mubr.f32.gmra.mrb[0].mxu0 %v36
  %v127 = vpop.f32.mrb[0].mxu0
  %v128 = vadd.f32 %v42, %v127
  %v129 = vpop.f32.mrb[0].mxu0
  %130 = vdwg.mxu0
  %v131 = vmax.f32 %v128, 0.0
  %v132 = vld [vmem:[%s3] sm:$0xff]
  %v133 = vld [vmem:[%s3 + $0x8] sm:$0xff]
  %v134 = vld [vmem:[%s3 + $0x10] sm:$0xff]
  %v135 = vld [vmem:[%s3 + $0x18] sm:$0xff]
  %v136 = vld [vmem:[%s3 + $0x20] sm:$0xff]
  %v137 = vld [vmem:[%s3 + $0x28] sm:$0xff]
  %v138 = vld [vmem:[%s3 + $0x30] sm:$0xff]
  %v139 = vld [vmem:[%s3 + $0x38] sm:$0xff]
  %vm140 = vcmask 523264
  %v142 = vsel %vm140, %v131, 0
  %144 = vmatprep.subr.mxu0 0.0
  %145 = vmatpush1.msra.mxu0 %v132
  %146 = vmatprep.subr.mxu0 0.0
  %147 = vmatpush1.msra.mxu0 %v133
  %148 = vmatprep.subr.mxu0 0.0
  %149 = vmatpush1.msra.mxu0 %v134
  %150 = vmatprep.subr.mxu0 0.0
  %151 = vmatpush1.msra.mxu0 %v135
  %152 = vmatprep.subr.mxu0 0.0
  %153 = vmatpush1.msra.mxu0 %v136
  %154 = vmatprep.subr.mxu0 0.0
  %155 = vmatpush1.msra.mxu0 %v137
  %156 = vmatprep.subr.mxu0 0.0
  %157 = vmatpush1.msra.mxu0 %v138
  %158 = vmatprep.subr.mxu0 0.0
  %159 = vmatpush1.msra.mxu0 %v139
  %160 = vmatprep.subr.mxu0 0.0
  %161 = vmatpush1.msra.mxu0 0.0
  %162 = vmatprep.subr.mxu0 0.0
  %163 = vmatpush1.msra.mxu0 0.0
  %164 = vmatprep.subr.mxu0 0.0
  %165 = vmatpush1.msra.mxu0 0.0
  %166 = vmatprep.subr.mxu0 0.0
  %167 = vmatpush1.msra.mxu0 0.0
  %168 = vmatprep.subr.mxu0 0.0
  %169 = vmatpush1.msra.mxu0 0.0
  %170 = vmatprep.subr.mxu0 0.0
  %171 = vmatpush1.msra.mxu0 0.0
  %172 = vmatprep.subr.mxu0 0.0
  %173 = vmatpush1.msra.mxu0 0.0
  %174 = vmatprep.subr.mxu0 0.0
  %175 = vmatpush1.msra.mxu0 0.0
  %176 = vmatprep.subr.mxu0 0.0
  %177 = vmatpush1.msra.mxu0 0.0
  %178 = vmatprep.subr.mxu0 0.0
  %179 = vmatpush1.msra.mxu0 0.0
  %180 = vmatprep.subr.mxu0 0.0
  %181 = vmatpush1.msra.mxu0 0.0
  %182 = vmatprep.subr.mxu0 0.0
  %183 = vmatpush1.msra.mxu0 0.0
  %184 = vmatprep.subr.mxu0 0.0
  %185 = vmatpush1.msra.mxu0 0.0
  %186 = vmatprep.subr.mxu0 0.0
  %187 = vmatpush1.msra.mxu0 0.0
  %188 = vmatprep.subr.mxu0 0.0
  %189 = vmatpush1.msra.mxu0 0.0
  %190 = vmatprep.subr.mxu0 0.0
  %191 = vmatpush1.msra.mxu0 0.0
  %192 = vmatprep.subr.mxu0 0.0
  %193 = vmatpush1.msra.mxu0 0.0
  %194 = vmatprep.subr.mxu0 0.0
  %195 = vmatpush1.msra.mxu0 0.0
  %196 = vmatprep.subr.mxu0 0.0
  %197 = vmatpush1.msra.mxu0 0.0
  %198 = vmatprep.subr.mxu0 0.0
  %199 = vmatpush1.msra.mxu0 0.0
  %200 = vmatprep.subr.mxu0 0.0
  %201 = vmatpush1.msra.mxu0 0.0
  %202 = vmatprep.subr.mxu0 0.0
  %203 = vmatpush1.msra.mxu0 0.0
  %204 = vmatprep.subr.mxu0 0.0
  %205 = vmatpush1.msra.mxu0 0.0
  %206 = vmatprep.subr.mxu0 0.0
  %207 = vmatpush1.msra.mxu0 0.0
  %208 = vmatprep.mubr.f32.mxu0 0.0
  %209 = vmatmul.mubr.f32.gmra.mrb[0].mxu0 %v142
  %v210 = vpop.f32.mrb[0].mxu0
  %v211 = vadd.f32 %v43, %v210
  %v212 = vpop.f32.mrb[0].mxu0
  %213 = vdwg.mxu0
  %v214 = vmul.f32 %v211, 0.5
  %v215 = vmul.f32 %v214, 1.442695
  %v216 = vpow.pop %v215
  %v217 = vmul.f32 %v216, %v216
  %219 = vrot.lane.b32.xlu0 %v37, 10
  %v220 = vpop.permute.xlu0 %219
  %v222 = vmul.f32 %v216, %v220
  %224 = vrot.lane.b32.xlu0 %v222, 118
  %v225 = vpop.permute.xlu0 %224
  %v227 = vadd.f32 %v211, %v225
  %228 = vrot.lane.b32.xlu0 %v37, 11
  %v229 = vpop.permute.xlu0 %228
  %v231 = vmul.f32 %v216, %v229
  %233 = vrot.lane.b32.xlu0 %v231, 127
  %v234 = vpop.permute.xlu0 %233
  %v236 = vadd.f32 %v211, %v234
  %v237 = vld [vmem:[%s4] sm:$0xff]
  %v238 = vld [vmem:[%s4 + $0x8] sm:$0x3]
  %vm239 = vcmask 80896
  %v241 = vsel %vm239, %v227, 0
  %vm243 = vcmask 1041408
  %v245 = vsel %vm243, %v238, 0
  %247 = vmatprep.subr.mxu0 0.0
  %248 = vmatpush1.msra.mxu0 %v237
  %249 = vmatprep.subr.mxu0 0.0
  %250 = vmatpush1.msra.mxu0 %v245
  %251 = vmatprep.subr.mxu0 0.0
  %252 = vmatpush1.msra.mxu0 0.0
  %253 = vmatprep.subr.mxu0 0.0
  %254 = vmatpush1.msra.mxu0 0.0
  %255 = vmatprep.subr.mxu0 0.0
  %256 = vmatpush1.msra.mxu0 0.0
  %257 = vmatprep.subr.mxu0 0.0
  %258 = vmatpush1.msra.mxu0 0.0
  %259 = vmatprep.subr.mxu0 0.0
  %260 = vmatpush1.msra.mxu0 0.0
  %261 = vmatprep.subr.mxu0 0.0
  %262 = vmatpush1.msra.mxu0 0.0
  %263 = vmatprep.subr.mxu0 0.0
  %264 = vmatpush1.msra.mxu0 0.0
  %265 = vmatprep.subr.mxu0 0.0
  %266 = vmatpush1.msra.mxu0 0.0
  %267 = vmatprep.subr.mxu0 0.0
  %268 = vmatpush1.msra.mxu0 0.0
  %269 = vmatprep.subr.mxu0 0.0
  %270 = vmatpush1.msra.mxu0 0.0
  %271 = vmatprep.subr.mxu0 0.0
  %272 = vmatpush1.msra.mxu0 0.0
  %273 = vmatprep.subr.mxu0 0.0
  %274 = vmatpush1.msra.mxu0 0.0
  %275 = vmatprep.subr.mxu0 0.0
  %276 = vmatpush1.msra.mxu0 0.0
  %277 = vmatprep.subr.mxu0 0.0
  %278 = vmatpush1.msra.mxu0 0.0
  %279 = vmatprep.subr.mxu0 0.0
  %280 = vmatpush1.msra.mxu0 0.0
  %281 = vmatprep.subr.mxu0 0.0
  %282 = vmatpush1.msra.mxu0 0.0
  %283 = vmatprep.subr.mxu0 0.0
  %284 = vmatpush1.msra.mxu0 0.0
  %285 = vmatprep.subr.mxu0 0.0
  %286 = vmatpush1.msra.mxu0 0.0
  %287 = vmatprep.subr.mxu0 0.0
  %288 = vmatpush1.msra.mxu0 0.0
  %289 = vmatprep.subr.mxu0 0.0
  %290 = vmatpush1.msra.mxu0 0.0
  %291 = vmatprep.subr.mxu0 0.0
  %292 = vmatpush1.msra.mxu0 0.0
  %293 = vmatprep.subr.mxu0 0.0
  %294 = vmatpush1.msra.mxu0 0.0
  %295 = vmatprep.subr.mxu0 0.0
  %296 = vmatpush1.msra.mxu0 0.0
  %297 = vmatprep.subr.mxu0 0.0
  %298 = vmatpush1.msra.mxu0 0.0
  %299 = vmatprep.subr.mxu0 0.0
  %300 = vmatpush1.msra.mxu0 0.0
  %301 = vmatprep.subr.mxu0 0.0
  %302 = vmatpush1.msra.mxu0 0.0
  %303 = vmatprep.subr.mxu0 0.0
  %304 = vmatpush1.msra.mxu0 0.0
  %305 = vmatprep.subr.mxu0 0.0
  %306 = vmatpush1.msra.mxu0 0.0
  %307 = vmatprep.subr.mxu0 0.0
  %308 = vmatpush1.msra.mxu0 0.0
  %309 = vmatprep.subr.mxu0 0.0
  %310 = vmatpush1.msra.mxu0 0.0
  %311 = vmatprep.mubr.f32.mxu0 0.0
  %312 = vmatmul.mubr.f32.gmra.mrb[0].mxu0 %v241
  %v313 = vpop.f32.mrb[0].mxu0
  %v314 = vadd.f32 %v44, %v313
  %v315 = vpop.f32.mrb[0].mxu0
  %316 = vdwg.mxu0
  %v317 = vmax.f32 %v314, 0.0
  %v318 = vld [vmem:[%s5] sm:$0xff]
  %v319 = vld [vmem:[%s5 + $0x8] sm:$0xff]
  %v320 = vld [vmem:[%s5 + $0x10] sm:$0xff]
  %v321 = vld [vmem:[%s5 + $0x18] sm:$0xff]
  %v322 = vld [vmem:[%s5 + $0x20] sm:$0xff]
  %v323 = vld [vmem:[%s5 + $0x28] sm:$0xff]
  %v324 = vld [vmem:[%s5 + $0x30] sm:$0xff]
  %v325 = vld [vmem:[%s5 + $0x38] sm:$0xff]
  %v327 = vlaneseq
  %v328 = vshrl.u32 %v327, 7
  %v329 = vsub.s32 0, %v328
  %v330 = vrot.slane %v38, %v329
  %v331 = vlaneseq
  %v332 = vshrl.u32 %v331, 7
  %v333 = vsub.s32 1, %v332
  %v334 = vrot.slane %v38, %v333
  %vm337 = vcmask 261120
  %v339 = vsel %vm337, %v317, 0
  %341 = vmatprep.subr.mxu0 %v319
  %342 = vmatpush1.msra.mxu0 %v318
  %343 = vmatprep.subr.mxu0 %v321
  %344 = vmatpush1.msra.mxu0 %v320
  %345 = vmatprep.subr.mxu0 %v323
  %346 = vmatpush1.msra.mxu0 %v322
  %347 = vmatprep.subr.mxu0 %v325
  %348 = vmatpush1.msra.mxu0 %v324
  %349 = vmatprep.subr.mxu0 0.0
  %350 = vmatpush1.msra.mxu0 0.0
  %351 = vmatprep.subr.mxu0 0.0
  %352 = vmatpush1.msra.mxu0 0.0
  %353 = vmatprep.subr.mxu0 0.0
  %354 = vmatpush1.msra.mxu0 0.0
  %355 = vmatprep.subr.mxu0 0.0
  %356 = vmatpush1.msra.mxu0 0.0
  %357 = vmatprep.subr.mxu0 0.0
  %358 = vmatpush1.msra.mxu0 0.0
  %359 = vmatprep.subr.mxu0 0.0
  %360 = vmatpush1.msra.mxu0 0.0
  %361 = vmatprep.subr.mxu0 0.0
  %362 = vmatpush1.msra.mxu0 0.0
  %363 = vmatprep.subr.mxu0 0.0
  %364 = vmatpush1.msra.mxu0 0.0
  %365 = vmatprep.subr.mxu0 0.0
  %366 = vmatpush1.msra.mxu0 0.0
  %367 = vmatprep.subr.mxu0 0.0
  %368 = vmatpush1.msra.mxu0 0.0
  %369 = vmatprep.subr.mxu0 0.0
  %370 = vmatpush1.msra.mxu0 0.0
  %371 = vmatprep.subr.mxu0 0.0
  %372 = vmatpush1.msra.mxu0 0.0
  %373 = vmatprep.subr.mxu0 0.0
  %374 = vmatpush1.msra.mxu0 0.0
  %375 = vmatprep.subr.mxu0 0.0
  %376 = vmatpush1.msra.mxu0 0.0
  %377 = vmatprep.subr.mxu0 0.0
  %378 = vmatpush1.msra.mxu0 0.0
  %379 = vmatprep.subr.mxu0 0.0
  %380 = vmatpush1.msra.mxu0 0.0
  %381 = vmatprep.subr.mxu0 0.0
  %382 = vmatpush1.msra.mxu0 0.0
  %383 = vmatprep.subr.mxu0 0.0
  %384 = vmatpush1.msra.mxu0 0.0
  %385 = vmatprep.subr.mxu0 0.0
  %386 = vmatpush1.msra.mxu0 0.0
  %387 = vmatprep.subr.mxu0 0.0
  %388 = vmatpush1.msra.mxu0 0.0
  %389 = vmatprep.subr.mxu0 0.0
  %390 = vmatpush1.msra.mxu0 0.0
  %391 = vmatprep.subr.mxu0 0.0
  %392 = vmatpush1.msra.mxu0 0.0
  %393 = vmatprep.subr.mxu0 0.0
  %394 = vmatpush1.msra.mxu0 0.0
  %395 = vmatprep.subr.mxu0 0.0
  %396 = vmatpush1.msra.mxu0 0.0
  %397 = vmatprep.subr.mxu0 0.0
  %398 = vmatpush1.msra.mxu0 0.0
  %399 = vmatprep.subr.mxu0 0.0
  %400 = vmatpush1.msra.mxu0 0.0
  %401 = vmatprep.subr.mxu0 0.0
  %402 = vmatpush1.msra.mxu0 0.0
  %403 = vmatprep.subr.mxu0 0.0
  %404 = vmatpush1.msra.mxu0 0.0
  %405 = vmatprep.mubr.f32.mxu0 0.0
  %406 = vmatmul.mubr.f32.gmra.mrb[0].mxu0 %v339
  %v407 = vpop.f32.mrb[0].mxu0
  %v408 = vadd.f32 %v330, %v407
  %v409 = vpop.f32.mrb[0].mxu0
  %v410 = vadd.f32 %v334, %v409
  %411 = vdwg.mxu0
  %412 = vmax.xlane.f32.xlu0 %v408
  %v413 = vpop.xlane.xlu0 %412
  %v414 = vsub.f32 %v408, %v413
  %v415 = vmul.f32 %v414, 1.442695
  %v416 = vpow.pop %v415
  %417 = vadd.xlane.f32.xlu0 %v416
  %v418 = vpop.xlane.xlu0 %417
  %v419 = vmul.f32 %v236, 1.442695
  %v420 = vpow.pop %v419
  %v421 = vrcp.pop %v418
  %v422 = vmul.f32 %v420, %v421
  %424 = vset.pattern.permute.xlu0 20
  %425 = vperm.xlu0 %424, %v422
  %v426 = vpop.permute.xlu0 %425
  %v428 = vmul.f32 %v426, %v416
  %430 = vset.pattern.permute.xlu0 20
  %431 = vperm.xlu0 %430, %v236
  %v432 = vpop.permute.xlu0 %431
  %v434 = vadd.f32 %v432, %v414
  %v435 = vlog2.pop %v418
  %v436 = vmul.f32 %v435, 0.6931472
  %v437 = vsub.f32 %v434, %v436
  %v438 = vsub.f32 0.0, %v410
  %v439 = vmax.f32 %v438, 0.0
  %v440 = vand.u32 2147483647, %v438
  %v441 = vsub.f32 0.0, %v440
  %v442 = vmul.f32 %v441, 1.442695
  %v443 = vpow.pop %v442
  %v444 = vadd.f32 %v443, 1.0
  %v445 = vlog2.pop %v444
  %v446 = vmul.f32 %v445, 0.6931472
  %v447 = vmul.f32 -0.5, %v443
  %v448 = vadd.f32 %v447, 1.0
  %v449 = vmul.f32 %v448, %v443
  %v450 = vand.u32 2147483647, %v443
  %vm451 = vcmp.lt.f32.partialorder %v450, 0.0004427343
  %v452 = vsel %vm451, %v449, %v446
  %v453 = vadd.f32 %v439, %v452
  %v454 = vadd.f32 %v39, %v428
  %v455 = vadd.f32 %v454, 1e-08
  %v456 = vlog2.pop %v455
  %v457 = vmul.f32 %v456, 0.6931472
  %v458 = vsub.f32 %v40, %v457
  %v459 = vmul.f32 %v39, %v458
  %v460 = vadd.f32 %v438, %v459
  %v461 = vadd.f32 %v26, %v39
  %v462 = vadd.f32 %v461, 5.5
  %v463 = vadd.f32 %v461, 0.5
  %v464 = vlog2.pop %v462
  %v465 = vmul.f32 %v464, 0.6931472
  %v466 = vmul.f32 %v463, %v465
  %v467 = vsub.f32 %v462, %v466
  %v468 = vadd.f32 %v461, 1.0
  %v469 = vrcp.pop %v468
  %v470 = vmul.f32 76.18009, %v469
  %v471 = vadd.f32 %v470, 1.0
  %v472 = vadd.f32 %v461, 2.0
  %v473 = vrcp.pop %v472
  %v474 = vmul.f32 86.50532, %v473
  %v475 = vsub.f32 %v471, %v474
  %v476 = vadd.f32 %v461, 3.0
  %v477 = vrcp.pop %v476
  %v478 = vmul.f32 24.0141, %v477
  %v479 = vadd.f32 %v475, %v478
  %v480 = vadd.f32 %v461, 4.0
  %v481 = vrcp.pop %v480
  %v482 = vmul.f32 1.2317395, %v481
  %v483 = vsub.f32 %v479, %v482
  %v484 = vadd.f32 %v461, 5.0
  %v485 = vrcp.pop %v484
  %v486 = vmul.f32 0.001208651, %v485
  %v487 = vadd.f32 %v483, %v486
  %v488 = vadd.f32 %v461, 6.0
  %v489 = vrcp.pop %v488
  %v490 = vmul.f32 5.3952394e-06, %v489
  %v491 = vsub.f32 %v487, %v490
  %v492 = vsub.f32 0.0, %v467
  %v493 = vmul.f32 %v491, 2.5066283
  %v494 = vrcp.pop %v461
  %v495 = vmul.f32 %v493, %v494
  %v496 = vlog2.pop %v495
  %v497 = vmul.f32 %v496, 0.6931472
  %v498 = vadd.f32 %v492, %v497
  %v499 = vsub.f32 %v498, %v41
  %v500 = vsub.f32 %v499, %v27
  %v501 = vmax.f32 %v460, 0.0
  %v502 = vand.u32 2147483647, %v460
  %v503 = vsub.f32 0.0, %v502
  %v504 = vmul.f32 %v503, 1.442695
  %v505 = vpow.pop %v504
  %v506 = vadd.f32 %v505, 1.0
  %v507 = vlog2.pop %v506
  %v508 = vmul.f32 %v507, 0.6931472
  %v509 = vmul.f32 -0.5, %v505
  %v510 = vadd.f32 %v509, 1.0
  %v511 = vmul.f32 %v510, %v505
  %v512 = vand.u32 2147483647, %v505
  %vm513 = vcmp.lt.f32.partialorder %v512, 0.0004427343
  %v514 = vsel %vm513, %v511, %v508
  %v515 = vadd.f32 %v501, %v514
  %v516 = vsub.f32 %v515, %v453
  %v517 = vsub.f32 0.0, %v453
  %v518 = vadd.f32 %v517, %v460
  %v519 = vsub.f32 %v437, %v457
  %v520 = vmul.f32 %v26, %v519
  %v521 = vadd.f32 %v518, %v520
  %v522 = vadd.f32 %v521, %v500
  %vm523 = vcmp.lt.f32.partialorder %v26, 1e-08
  %v524 = vsel %vm523, %v516, %v522
  %525 = vadd.xlane.f32.xlu0 %v524
  %v526 = vpop.xlane.xlu0 %525
  %v527 = vsub.f32 0.0, %v526
  %v528 = vmul.f32 %v211, %v211
  %530 = vrot.lane.b32.xlu0 %v528, 10
  %v531 = vpop.permute.xlu0 %530
  %v533 = vadd.f32 %v217, %v531
  %v534 = vsub.f32 %v533, 1.0
  %v535 = vsub.f32 %v534, %v211
  %v536 = vmul.f32 %v535, 0.5
  %538 = vrot.lane.b32.xlu0 %v536, 118
  %v539 = vpop.permute.xlu0 %538
  %v541 = vsel %vm239, %v539, 0.0
  %542 = vadd.xlane.f32.xlu0 %v541
  %v543 = vpop.xlane.xlu0 %542
  %544 = vrot.lane.b32.xlu0 %v37, 9
  %v545 = vpop.permute.xlu0 %544
  %v547 = vsub.f32 %v211, %v545
  %549 = vrot.lane.b32.xlu0 %v211, 119
  %v550 = vpop.permute.xlu0 %549
  %v552 = vsub.f32 %v37, %v550
  %v553 = vmul.f32 %v552, 0.5
  %v554 = vmul.f32 %v547, %v547
  %556 = vrot.lane.b32.xlu0 %v554, 1
  %v557 = vpop.permute.xlu0 %556
  %v559 = vadd.f32 %v217, %v557
  %560 = vrot.lane.b32.xlu0 %v37, 8
  %v561 = vpop.permute.xlu0 %560
  %v563 = vmul.f32 %v559, %v561
  %565 = vrot.lane.b32.xlu0 %v563, 119
  %v566 = vpop.permute.xlu0 %565
  %v568 = vadd.f32 %v553, %v566
  %v569 = vsub.f32 %v568, 0.5
  %v570 = vadd.f32 %v527, %v569
  %572 = vrot.lane.b32.xlu0 %v570, 116
  %v573 = vpop.permute.xlu0 %572
  %vm575 = vcmask 7168
  %576 = vst.msk [vmem:[%s7] sm:$0xff] %vm575, %v573
  %vm577 = vcmask 15368
  %578 = vst.msk [vmem:[%s7] sm:$0xff] %vm577, %v543
  // Predicated region
  $region30: #{_ae_forward_fn.1} parent=0 // pred_check
    _
  $region31: #{_ae_forward_fn.1} parent=0 // pred_check_branch
    %580 = sbr.rel (0) target = $region33
  $region32: #{_ae_forward_fn.1} parent=0 // pred_region
    _
  $region33: #{_ae_forward_fn.1} parent=0 // pred_fallthru
    _
  // Predicated region
  $region34: #{_ae_forward_fn.1} parent=0 // pred_check
    _
  $region35: #{_ae_forward_fn.1} parent=0 // pred_check_branch
    %582 = sbr.rel (0) target = $region37
  $region36: #{_ae_forward_fn.1} parent=0 // pred_region
    _
  $region37: #{_ae_forward_fn.1} parent=0 // pred_fallthru
    _

</llo_original>
